<compile_context>
chip_gen: v7x
topology: tpu7x:2x2x1
jax: 0.10.0
libtpu: 0.0.40
codegen_flags: <defaults>
</compile_context>

<pallas_src>
import math

import jax
import jax.numpy as jnp
from jax.experimental import pallas as pl
from jax.experimental.pallas import tpu as pltpu

_LANES = 128


def _round_up(n: int, m: int) -> int:
    return ((n + m - 1) // m) * m


def _attack_kernel(params_ref, x_ref, o_ref):
    """Fused Linear(3->64) -> Linear(64->2) -> Softmax, reduced to one sigmoid.

    params_ref: SMEM (in_dim+1,) f32 = [wd_0..wd_{in_dim-1}, bd] where
                wd = Wc[:,0]-Wc[:,1] and bd = bc[0]-bc[1] (fused linears).
    x_ref:      VMEM (in_dim, TB)  feature-major, lane-dense batch tile.
    o_ref:      VMEM (2, TB)       feature-major class probabilities.
    """
    in_dim = x_ref.shape[0]

    # d = logit0 - logit1: SMEM-scalar x full-lane-row FMA chain (pure VPU;
    # K=3 is far too small for the MXU).
    d = x_ref[0:1, :] * params_ref[0]
    for k in range(1, in_dim):
        d = d + x_ref[k:k + 1, :] * params_ref[k]
    d = d + params_ref[in_dim]

    # 2-class softmax == sigmoid of the logit difference: single EUP exp,
    # exact p0 + p1 == 1 (no approx reciprocal).
    p0 = 1.0 / (1.0 + jnp.exp(-d))
    o_ref[0:1, :] = p0.astype(o_ref.dtype)
    o_ref[1:2, :] = (1.0 - p0).astype(o_ref.dtype)


def attack_forward(x, w1, b1, w2, b2, *, block_batch=65536):
    """softmax(linear2(linear1(x)), axis=1).

    x: [B, in_dim]; w1: [in_dim, 64]; b1: [1, 64]; w2: [64, 2]; b2: [1, 2]
    (weights stored as [in, out], i.e. PyTorch W.T).  Returns [B, 2] f32.
    """
    batch, in_dim = x.shape

    # Trace-time algebraic fusion of the two Linears + 2-class softmax:
    #   softmax(x @ W1 @ W2 + (b1 @ W2 + b2))  ==  [sigmoid(x.wd + bd), 1 - .]
    w1f = w1.astype(jnp.float32)
    w2f = w2.astype(jnp.float32)
    wc = w1f @ w2f                                               # (in_dim, 2)
    bc = b1.astype(jnp.float32) @ w2f + b2.astype(jnp.float32)   # (1, 2)
    wd = wc[:, 0] - wc[:, 1]                                     # (in_dim,)
    bd = bc[0, 0] - bc[0, 1]                                     # scalar
    params = jnp.concatenate([wd, bd[None]]).astype(jnp.float32)  # (in_dim+1,)

    # Feature-major (lane-dense) layout: batch on the 128-lane axis.
    # TODO(synk): have the producer/consumer use feature-major activations so
    # these wrapper transposes disappear entirely.
    x_fm = x.astype(jnp.float32).T                               # (in_dim, B)

    # Lane-axis tiling: multiples of 128 lanes, large tiles to amortize the
    # per-step pipeline cost, and >= 2 grid steps when there is enough work so
    # both v7x TensorCores get a share of this mem-bound kernel.
    padded = _round_up(batch, _LANES)
    tb = min(_round_up(block_batch, _LANES), padded)
    if padded >= 2 * _LANES and padded // tb < 2:
        tb = _round_up(-(-padded // 2), _LANES)
    padded = _round_up(batch, tb)
    if padded != batch:
        # Fuses with the transpose above; keeps every grid step a full tile
        # (zero columns produce harmless sigmoid(bd) rows that are sliced off).
        x_fm = jnp.pad(x_fm, ((0, 0), (0, padded - batch)))
    grid = padded // tb

    out_fm = pl.pallas_call(
        _attack_kernel,
        out_shape=jax.ShapeDtypeStruct((2, padded), jnp.float32),
        grid_spec=pltpu.PrefetchScalarGridSpec(
            num_scalar_prefetch=0,
            grid=(grid,),
            in_specs=[
                # Fused weight-diff / bias-diff scalars, resident in SMEM.
                pl.BlockSpec(memory_space=pltpu.MemorySpace.SMEM),
                # x tile: (in_dim, TB) — contiguous, lane-dense DMA.
                pl.BlockSpec((in_dim, tb), lambda i: (0, i)),
            ],
            out_specs=pl.BlockSpec((2, tb), lambda i: (0, i)),
        ),
        compiler_params=pltpu.CompilerParams(
            # Batch tiles are independent -> shard the grid across v7x's 2 TCs.
            dimension_semantics=("parallel",),
        ),
    )(params, x_fm)

    return out_fm[:, :batch].T


def init_params(key, input_dim=3, hidden=64, out_dim=2):
    # Deterministic init mimicking PyTorch Linear default (+/- 1/sqrt(fan_in)).
    k1, k2, k3, k4 = jax.random.split(key, 4)
    bound1 = 1.0 / math.sqrt(input_dim)
    bound2 = 1.0 / math.sqrt(hidden)
    w1 = jax.random.uniform(k1, (input_dim, hidden), jnp.float32, -bound1, bound1)
    b1 = jax.random.uniform(k2, (1, hidden), jnp.float32, -bound1, bound1)
    w2 = jax.random.uniform(k3, (hidden, out_dim), jnp.float32, -bound2, bound2)
    b2 = jax.random.uniform(k4, (1, out_dim), jnp.float32, -bound2, bound2)
    return w1, b1, w2, b2


def reference_forward(x, w1, b1, w2, b2):
    # Unfused two-matmul reference (matches the PyTorch module).
    h = x @ w1 + b1
    logits = h @ w2 + b2
    return jax.nn.softmax(logits, axis=1)


if __name__ == "__main__":
    key = jax.random.PRNGKey(0)
    k_x, k_x2, k_p = jax.random.split(key, 3)

    input_dim = 3
    w1, b1, w2, b2 = init_params(k_p, input_dim=input_dim)

    # Small tolerance: trace-time W1@W2 fusion + sigmoid-vs-softmax rounding only.
    ATOL = 1e-4

    # Small demo batch (single grid step, full-array block).
    x = jax.random.normal(k_x, (8, input_dim), jnp.float32)
    out = jax.block_until_ready(attack_forward(x, w1, b1, w2, b2))
    ref = reference_forward(x, w1, b1, w2, b2)
    assert out.shape == (8, 2)
    assert jnp.allclose(out, ref, atol=ATOL, rtol=ATOL), "mismatch vs reference (B=8)"
    assert jnp.allclose(jnp.sum(out, axis=1), 1.0, atol=1e-5), "softmax rows must sum to 1"

    # Exercise the multi-step grid + ragged-batch path (3 tiles of 128 lanes).
    x2 = jax.random.normal(k_x2, (300, input_dim), jnp.float32)
    out2 = jax.block_until_ready(attack_forward(x2, w1, b1, w2, b2, block_batch=128))
    ref2 = reference_forward(x2, w1, b1, w2, b2)
    assert out2.shape == (300, 2)
    assert jnp.allclose(out2, ref2, atol=ATOL, rtol=ATOL), "mismatch vs reference (B=300)"
    assert jnp.allclose(jnp.sum(out2, axis=1), 1.0, atol=1e-5), "softmax rows must sum to 1"

    print("KERNEL_OK")
</pallas_src>

<mosaic_0001>
module attributes {stable_mosaic.version = 11 : i64} {
  func.func @_attack_kernel(%arg0: i32, %arg1: memref<4xf32, #tpu.memory_space<smem>>, %arg2: memref<3x128xf32, #tpu.memory_space<vmem>>, %arg3: memref<2x128xf32, #tpu.memory_space<vmem>>) attributes {dimension_semantics = [#tpu.dimension_semantics<parallel>], iteration_bounds = array<i64: 1>, scalar_prefetch = 0 : i64, scratch_operands = 0 : i64, tpu.core_type = #tpu.core_type<tc>, window_params = [{transform_indices = @transform_0, window_bounds = array<i64: 4>}, {transform_indices = @transform_1, window_bounds = array<i64: 3, 128>}, {transform_indices = @transform_2, window_bounds = array<i64: 2, 128>}]} {
    %c0 = arith.constant 0 : index
    %c0_0 = arith.constant 0 : index
    %0 = vector.load %arg2[%c0, %c0_0] : memref<3x128xf32, #tpu.memory_space<vmem>>, vector<1x128xf32>
    %c0_1 = arith.constant 0 : index
    %1 = memref.load %arg1[%c0_1] : memref<4xf32, #tpu.memory_space<smem>>
    %2 = vector.broadcast %1 : f32 to vector<1x128xf32>
    %3 = arith.mulf %0, %2 : vector<1x128xf32>
    %c1 = arith.constant 1 : index
    %c0_2 = arith.constant 0 : index
    %4 = vector.load %arg2[%c1, %c0_2] : memref<3x128xf32, #tpu.memory_space<vmem>>, vector<1x128xf32>
    %c1_3 = arith.constant 1 : index
    %5 = memref.load %arg1[%c1_3] : memref<4xf32, #tpu.memory_space<smem>>
    %6 = vector.broadcast %5 : f32 to vector<1x128xf32>
    %7 = arith.mulf %4, %6 : vector<1x128xf32>
    %8 = arith.addf %3, %7 : vector<1x128xf32>
    %c2 = arith.constant 2 : index
    %c0_4 = arith.constant 0 : index
    %9 = vector.load %arg2[%c2, %c0_4] : memref<3x128xf32, #tpu.memory_space<vmem>>, vector<1x128xf32>
    %c2_5 = arith.constant 2 : index
    %10 = memref.load %arg1[%c2_5] : memref<4xf32, #tpu.memory_space<smem>>
    %11 = vector.broadcast %10 : f32 to vector<1x128xf32>
    %12 = arith.mulf %9, %11 : vector<1x128xf32>
    %13 = arith.addf %8, %12 : vector<1x128xf32>
    %c3 = arith.constant 3 : index
    %14 = memref.load %arg1[%c3] : memref<4xf32, #tpu.memory_space<smem>>
    %15 = vector.broadcast %14 : f32 to vector<1x128xf32>
    %16 = arith.addf %13, %15 : vector<1x128xf32>
    %cst = arith.constant 0.000000e+00 : f32
    %17 = vector.broadcast %cst : f32 to vector<1x128xf32>
    %18 = arith.subf %17, %16 : vector<1x128xf32>
    %19 = math.exp %18 : vector<1x128xf32>
    %cst_6 = arith.constant 1.000000e+00 : f32
    %20 = vector.broadcast %cst_6 : f32 to vector<1x128xf32>
    %21 = arith.addf %20, %19 : vector<1x128xf32>
    %cst_7 = arith.constant 1.000000e+00 : f32
    %22 = vector.broadcast %cst_7 : f32 to vector<1x128xf32>
    %23 = arith.divf %22, %21 : vector<1x128xf32>
    %c0_8 = arith.constant 0 : index
    %c0_9 = arith.constant 0 : index
    %24 = vector.load %arg3[%c0_8, %c0_9] : memref<2x128xf32, #tpu.memory_space<vmem>>, vector<1x128xf32>
    tpu.vector_store %arg3[%c0_8, %c0_9], %23 {strides = array<i32>} : memref<2x128xf32, #tpu.memory_space<vmem>>, vector<1x128xf32>,
    %cst_10 = arith.constant 1.000000e+00 : f32
    %25 = vector.broadcast %cst_10 : f32 to vector<1x128xf32>
    %26 = arith.subf %25, %23 : vector<1x128xf32>
    %c1_11 = arith.constant 1 : index
    %c0_12 = arith.constant 0 : index
    %27 = vector.load %arg3[%c1_11, %c0_12] : memref<2x128xf32, #tpu.memory_space<vmem>>, vector<1x128xf32>
    tpu.vector_store %arg3[%c1_11, %c0_12], %26 {strides = array<i32>} : memref<2x128xf32, #tpu.memory_space<vmem>>, vector<1x128xf32>,
    return
  }
  func.func @transform_0(%arg0: i32) -> i32 {
    %c0_i32 = arith.constant 0 : i32
    %c0_i32_0 = arith.constant 0 : i32
    return %c0_i32 : i32
  }
  func.func @transform_1(%arg0: i32) -> (i32, i32) {
    %c0_i32 = arith.constant 0 : i32
    %c0_i32_0 = arith.constant 0 : i32
    return %c0_i32, %arg0 : i32, i32
  }
  func.func @transform_2(%arg0: i32) -> (i32, i32) {
    %c0_i32 = arith.constant 0 : i32
    %c0_i32_0 = arith.constant 0 : i32
    return %c0_i32, %arg0 : i32, i32
  }
}

</mosaic_0001>

<llo_original>
// kernel: tpu_custom_call.1
$region0: #{tpu_custom_call.1}
  #allocation0 [shape = 'u32[]', space=smem, size = 0x4, offset = 0x4, fixed_abs, tag = 'smem constant byte address 0x4 - core index']
  #allocation1 [shape = 'u32[144,128]{1,0:T(1,128)}', space=vmem, size = 0x12000, scoped, tag = 'internal scratch']
  %s0 = inlined_call_operand.hbm [shape: f32[4], index: 0, kind: input, shape index: {}]
  %s1 = inlined_call_operand.hbm [shape: f32[3,128], index: 1, kind: input, shape index: {}]
  %s2 = inlined_call_operand.hbm [shape: f32[2,128], index: 2, kind: output, shape index: {}]
  %s3 = sld [smem:[#allocation0]]
  $region26: #{tpu_custom_call.1} parent=0
    _
  %s5 = ssub.s32 1, %s3
  %s6 = scalar_select 0, %s5, %s3
  $region1: #{tpu_custom_call.1} parent=0
    #allocation2 [shape = 'u8[512]{0}', space=smem, size = 0x200, scoped, tag = 'input window, operand 0, single buffered']
    #allocation3 [shape = 's32[1]{0}', space=sflag, size = 0x4, scoped, tag = 'scoped memory for tpu_custom_call.1']
    #allocation4 [shape = 's32[1]{0}', space=sflag, size = 0x4, scoped, tag = 'scoped memory for tpu_custom_call.1']
    #allocation5 [shape = 's32[1]{0}', space=sflag, size = 0x4, scoped, tag = 'scoped memory for tpu_custom_call.1']
    #allocation6 [shape = 'u8[2048]{0}', space=vmem, size = 0x800, scoped, tag = 'input window, operand 1, single buffered']
    #allocation7 [shape = 'u8[1024]{0}', space=vmem, size = 0x400, scoped, tag = 'output window, operand 0, single buffered']
    %7 = vsyncpa [#allocation5], 0
    %8 = vsyncpa [#allocation3], 0
    %9 = vsyncpa [#allocation4], 0
    // Predicated region
    $region2: #{tpu_custom_call.1} parent=1 // pred_check
      _
    $region3: #{tpu_custom_call.1} parent=1 // pred_check_branch
      %11 = sbr.rel (0) target = $region5
    $region4: #{tpu_custom_call.1} parent=1 // pred_region
      %s13 = ssub.s32 16, 16
      %14 = vsyncadd [#allocation5], %s13
      %17 = dma.hbm_to_smem %s0, 16, [#allocation2], [#allocation5]
    $region5: #{tpu_custom_call.1} parent=1 // pred_fallthru
      _
    // Predicated region
    $region6: #{tpu_custom_call.1} parent=1 // pred_check
      _
    $region7: #{tpu_custom_call.1} parent=1 // pred_check_branch
      %19 = sbr.rel (0) target = $region9
    $region8: #{tpu_custom_call.1} parent=1 // pred_region
      %s21 = ssub.s32 64, 64
      %22 = vsyncadd [#allocation3], %s21
      %s24 = sshll.u32 [#allocation6], 4
      %s25 = int_to_ptr.vmem [resolvable:$true] %s24
      %27 = dma.hbm_to_vmem [thread:$0]  %s1, 64, %s25, [#allocation3]
    $region9: #{tpu_custom_call.1} parent=1 // pred_fallthru
      _
    // Predicated region
    $region10: #{tpu_custom_call.1} parent=1 // pred_check
      _
    $region11: #{tpu_custom_call.1} parent=1 // pred_check_branch
      %29 = sbr.rel (0) target = $region13
    $region12: #{tpu_custom_call.1} parent=1 // pred_region
      %30 = dma.done [#allocation5], 16
    $region13: #{tpu_custom_call.1} parent=1 // pred_fallthru
      _
    // Predicated region
    $region14: #{tpu_custom_call.1} parent=1 // pred_check
      _
    $region15: #{tpu_custom_call.1} parent=1 // pred_check_branch
      %32 = sbr.rel (0) target = $region17
    $region16: #{tpu_custom_call.1} parent=1 // pred_region
      %33 = dma.done [#allocation3], 64
    $region17: #{tpu_custom_call.1} parent=1 // pred_fallthru
      _
    %34 = sfence
    %v35 = vld [vmem:[#allocation6] sm:$0x1]
    %s36 = sld [smem:[#allocation2]]
    %v37 = vstv %s36
    %v38 = vmul.f32 %v35, %v37
    %v39 = vld [vmem:[#allocation6 + $0x1] sm:$0x1]
    %s40 = sld [smem:[#allocation2 + $0x1]]
    %v41 = vstv %s40
    %v42 = vmul.f32 %v39, %v41
    %v43 = vadd.f32 %v38, %v42
    %v44 = vld [vmem:[#allocation6 + $0x2] sm:$0x1]
    %s45 = sld [smem:[#allocation2 + $0x2]]
    %v46 = vstv %s45
    %v47 = vmul.f32 %v44, %v46
    %v48 = vadd.f32 %v43, %v47
    %s49 = sld [smem:[#allocation2 + $0x3]]
    %v50 = vstv %s49
    %v51 = vadd.f32 %v48, %v50
    %v52 = vsub.f32 0.0, %v51
    %v53 = vmul.f32 %v52, 1.442695
    %v54 = vpow.pop %v53
    %v55 = vadd.f32 %v54, 1.0
    %v56 = vrcp.pop %v55
    %v57 = vmul.f32 1.0, %v56
    %58 = vst [vmem:[#allocation7] sm:$0x1] %v57
    %v59 = vsub.f32 1.0, %v57
    %60 = vst [vmem:[#allocation7 + $0x1] sm:$0x1] %v59
    // Predicated region
    $region18: #{tpu_custom_call.1} parent=1 // pred_check
      _
    $region19: #{tpu_custom_call.1} parent=1 // pred_check_branch
      %62 = sbr.rel (0) target = $region21
    $region20: #{tpu_custom_call.1} parent=1 // pred_region
      %s64 = ssub.s32 32, 32
      %65 = vsyncadd [#allocation4], %s64
      %s67 = sshll.u32 [#allocation7], 4
      %s68 = int_to_ptr.vmem [resolvable:$true] %s67
      %70 = dma.vmem_to_hbm [thread:$0]  %s68, 32, %s2, [#allocation4]
    $region21: #{tpu_custom_call.1} parent=1 // pred_fallthru
      _
    // Predicated region
    $region22: #{tpu_custom_call.1} parent=1 // pred_check
      _
    $region23: #{tpu_custom_call.1} parent=1 // pred_check_branch
      %72 = sbr.rel (0) target = $region25
    $region24: #{tpu_custom_call.1} parent=1 // pred_region
      %73 = dma.done [#allocation4], 32
    $region25: #{tpu_custom_call.1} parent=1 // pred_fallthru
      _
    %74 = vsyncpa [#allocation3], 1
    %75 = vsyncpa [#allocation4], 1
    %76 = vsyncpa [#allocation5], 1

</llo_original>
